<compile_context>
chip_gen: v5e
topology: v5e:2x2
jax: 0.10.0
libtpu: 0.0.40
codegen_flags: <defaults>
</compile_context>

<pallas_src>
import math
import jax
import jax.numpy as jnp
from jax.experimental import pallas as pl
from jax.experimental.pallas import tpu as pltpu


def _matvec_kernel(x_ref, v_ref, o_ref):
    # scores_tile = x_tile @ v  -> (TM, 1); f32 accumulation on the MXU,
    # cast only the final tile to the output dtype.
    o_ref[...] = jnp.dot(
        x_ref[...], v_ref[...], preferred_element_type=jnp.float32
    ).astype(o_ref.dtype)


def _choose_row_tile(n, h, itemsize, target_tile_bytes):
    """Pick TM: ~target_tile_bytes per x tile, multiple of 8 rows, and
    (when N allows) at least two tiles so v7x's second TensorCore is used."""
    if n <= 8:
        return n
    tm = max(8, target_tile_bytes // (h * itemsize))
    tm = (tm // 8) * 8
    tm = min(tm, 4096)
    # Keep grid_n >= 2 for megacore sharding (harmless on v5e/v6e).
    half = ((pl.cdiv(n, 2) + 7) // 8) * 8
    tm = min(tm, half)
    if tm >= n:
        return n
    return max(8, tm)


def discriminator_forward(x, weight, summary, *, block_rows=None,
                          target_tile_bytes=8 << 20):
    """x: (N, H), weight: (H, H), summary: (H,). Returns (N,) = x @ (W @ s)."""
    n, h = x.shape

    # ---- Stage 1: v = W @ summary (tiny one-shot matvec; let XLA do it,
    # keep the intermediate in float32) ---------------------------------------
    v = jnp.dot(
        weight.astype(jnp.float32),
        summary.astype(jnp.float32),
        preferred_element_type=jnp.float32,
    ).reshape(h, 1)

    # ---- Stage 2: scores = x @ v, streamed over adaptive N-row tiles --------
    itemsize = jnp.dtype(x.dtype).itemsize
    if block_rows is None:
        tm = _choose_row_tile(n, h, itemsize, target_tile_bytes)
    else:
        tm = min(int(block_rows), n)
        if tm < n:
            tm = max(8, (tm // 8) * 8)   # (8,128) layout rule on partial tiles
    grid_n = pl.cdiv(n, tm)

    # Explicit scoped-VMEM budget: double-buffered x tiles + headroom,
    # well under v7x's 64 MiB/TC physical limit (v5e default is only 16 MiB).
    tile_bytes = tm * h * itemsize
    vmem_bytes = int(min(48 << 20, max(16 << 20, 4 * tile_bytes)))

    out = pl.pallas_call(
        _matvec_kernel,
        out_shape=jax.ShapeDtypeStruct((n, 1), x.dtype),
        grid_spec=pltpu.PrefetchScalarGridSpec(
            num_scalar_prefetch=0,
            grid=(grid_n,),
            in_specs=[
                pl.BlockSpec((tm, h), lambda i: (i, 0)),  # x row tile (streamed)
                pl.BlockSpec((h, 1), lambda i: (0, 0)),   # v (tiny, f32, resident)
            ],
            out_specs=pl.BlockSpec((tm, 1), lambda i: (i, 0)),
        ),
        compiler_params=pltpu.CompilerParams(
            # Independent N-tiles: sharded across v7x's 2 TensorCores;
            # no-op on single-core v5e/v6e.
            dimension_semantics=("parallel",),
            vmem_limit_bytes=vmem_bytes,
        ),
        cost_estimate=pl.CostEstimate(
            flops=2 * n * h,
            transcendentals=0,
            bytes_accessed=n * h * itemsize + h * 4 + n * itemsize,
        ),
    )(x, v)
    return out[:, 0]


def init_discriminator_weight(key, hidden_dim, dtype=jnp.float32):
    # PyG's uniform(size, tensor): bound = 1/sqrt(size), U(-bound, bound)
    bound = 1.0 / math.sqrt(hidden_dim)
    return jax.random.uniform(
        key, (hidden_dim, hidden_dim), dtype=dtype, minval=-bound, maxval=bound
    )


if __name__ == "__main__":
    key = jax.random.PRNGKey(0)

    # --- Case 1: tiny shape matching the module semantics (single tile) -----
    hidden_dim = 32
    num_nodes = 8
    kw, kx, ks, k2 = jax.random.split(key, 4)
    weight = init_discriminator_weight(kw, hidden_dim)
    x = jax.random.normal(kx, (num_nodes, hidden_dim), dtype=jnp.float32)
    summary = jax.random.normal(ks, (hidden_dim,), dtype=jnp.float32)

    out = jax.block_until_ready(discriminator_forward(x, weight, summary))
    ref = x @ (weight @ summary)
    assert out.shape == (num_nodes,)
    assert jnp.allclose(out, ref, atol=1e-4, rtol=1e-4)

    # --- Case 2: explicit tile size -> grid > 1 with a partial last tile ----
    hidden_dim2 = 32
    num_nodes2 = 300
    kw2, kx2, ks2 = jax.random.split(k2, 3)
    weight2 = init_discriminator_weight(kw2, hidden_dim2)
    x2 = jax.random.normal(kx2, (num_nodes2, hidden_dim2), dtype=jnp.float32)
    summary2 = jax.random.normal(ks2, (hidden_dim2,), dtype=jnp.float32)

    out2 = jax.block_until_ready(
        discriminator_forward(x2, weight2, summary2, block_rows=128))
    ref2 = x2 @ (weight2 @ summary2)
    assert out2.shape == (num_nodes2,)
    assert jnp.allclose(out2, ref2, atol=1e-4, rtol=1e-4)

    # --- Case 3: adaptive tiling path (splits N so grid_n >= 2) -------------
    out3 = jax.block_until_ready(discriminator_forward(x2, weight2, summary2))
    assert out3.shape == (num_nodes2,)
    assert jnp.allclose(out3, ref2, atol=1e-4, rtol=1e-4)

    print("KERNEL_OK")
</pallas_src>

<mosaic_0001>
module attributes {stable_mosaic.version = 11 : i64} {
  func.func @_matvec_kernel(%arg0: i32, %arg1: memref<8x32xf32, #tpu.memory_space<vmem>>, %arg2: memref<32x1xf32, #tpu.memory_space<vmem>>, %arg3: memref<8x1xf32, #tpu.memory_space<vmem>>) attributes {dimension_semantics = [#tpu.dimension_semantics<parallel>], iteration_bounds = array<i64: 1>, scalar_prefetch = 0 : i64, scratch_operands = 0 : i64, tpu.core_type = #tpu.core_type<tc>, window_params = [{transform_indices = @transform_0, window_bounds = array<i64: 8, 32>}, {pipeline_mode = #tpu.pipeline_mode<synchronous>, transform_indices = @transform_1, window_bounds = array<i64: 32, 1>}, {transform_indices = @transform_2, window_bounds = array<i64: 8, 1>}]} {
    %c0 = arith.constant 0 : index
    %c0_0 = arith.constant 0 : index
    %0 = vector.load %arg1[%c0, %c0_0] : memref<8x32xf32, #tpu.memory_space<vmem>>, vector<8x32xf32>
    %c0_1 = arith.constant 0 : index
    %c0_2 = arith.constant 0 : index
    %1 = vector.load %arg2[%c0_1, %c0_2] : memref<32x1xf32, #tpu.memory_space<vmem>>, vector<32x1xf32>
    %cst = arith.constant dense<0.000000e+00> : vector<8x1xf32>
    %2 = tpu.matmul %0, %1, %cst {dimension_numbers = #tpu.dot_dimension_numbers<[1], [0], [0], [1], [0, 0, 1, 1], [], []>} : vector<8x32xf32>, vector<32x1xf32>, vector<8x1xf32> -> vector<8x1xf32>
    %c0_3 = arith.constant 0 : index
    %c0_4 = arith.constant 0 : index
    %3 = vector.load %arg3[%c0_3, %c0_4] : memref<8x1xf32, #tpu.memory_space<vmem>>, vector<8x1xf32>
    tpu.vector_store %arg3[%c0_3, %c0_4], %2 {strides = array<i32>} : memref<8x1xf32, #tpu.memory_space<vmem>>, vector<8x1xf32>,
    return
  }
  func.func @transform_0(%arg0: i32) -> (i32, i32) {
    %c0_i32 = arith.constant 0 : i32
    %c0_i32_0 = arith.constant 0 : i32
    return %arg0, %c0_i32 : i32, i32
  }
  func.func @transform_1(%arg0: i32) -> (i32, i32) {
    %c0_i32 = arith.constant 0 : i32
    %c0_i32_0 = arith.constant 0 : i32
    %c0_i32_1 = arith.constant 0 : i32
    return %c0_i32, %c0_i32_0 : i32, i32
  }
  func.func @transform_2(%arg0: i32) -> (i32, i32) {
    %c0_i32 = arith.constant 0 : i32
    %c0_i32_0 = arith.constant 0 : i32
    return %arg0, %c0_i32 : i32, i32
  }
}

</mosaic_0001>

<llo_original>
// kernel: tpu_custom_call.1
$region0: #{tpu_custom_call.1}
  #allocation0 [shape = 'u32[]', space=smem, size = 0x4, offset = 0x4, fixed_abs, tag = 'smem constant byte address 0x4 - core index']
  #allocation1 [shape = 'u32[72,128]{1,0:T(1,128)}', space=vmem, size = 0x9000, scoped, tag = 'internal scratch']
  %s0 = inlined_call_operand.vmem [shape: f32[8,32], index: 0, kind: input, shape index: {}]
  %s1 = inlined_call_operand.vmem [shape: f32[32,1], index: 1, kind: input, shape index: {}]
  %s2 = inlined_call_operand.vmem [shape: f32[8,1], index: 2, kind: output, shape index: {}]
  %s3 = sld [smem:[#allocation0]]
  $region18: #{tpu_custom_call.1} parent=0
    _
  %s5 = ssub.s32 1, %s3
  %s6 = scalar_select 0, %s5, %s3
  // Predicated region
  $region2: #{tpu_custom_call.1} parent=0 // pred_check
    _
  $region3: #{tpu_custom_call.1} parent=0 // pred_check_branch
    %8 = sbr.rel (0) target = $region5
  $region4: #{tpu_custom_call.1} parent=0 // pred_region
    _
  $region5: #{tpu_custom_call.1} parent=0 // pred_fallthru
    _
  // Predicated region
  $region6: #{tpu_custom_call.1} parent=0 // pred_check
    _
  $region7: #{tpu_custom_call.1} parent=0 // pred_check_branch
    %10 = sbr.rel (0) target = $region9
  $region8: #{tpu_custom_call.1} parent=0 // pred_region
    _
  $region9: #{tpu_custom_call.1} parent=0 // pred_fallthru
    _
  %v11 = vld [vmem:[%s0] sm:$0xff]
  %v12 = vld [vmem:[%s1] sm:$0xff]
  %v13 = vld [vmem:[%s1 + $0x8] sm:$0xff]
  %v14 = vld [vmem:[%s1 + $0x10] sm:$0xff]
  %v15 = vld [vmem:[%s1 + $0x18] sm:$0xff]
  %vm16 = vcmask 261120
  %v18 = vsel %vm16, %v11, 0
  %20 = vmatpush.msra.mxu0 0.0
  %21 = vmatpush.msra.mxu0 0.0
  %22 = vmatpush.msra.mxu0 0.0
  %23 = vmatpush.msra.mxu0 0.0
  %24 = vmatpush.msra.mxu0 0.0
  %25 = vmatpush.msra.mxu0 0.0
  %26 = vmatpush.msra.mxu0 0.0
  %27 = vmatpush.msra.mxu0 0.0
  %28 = vmatpush.msra.mxu0 0.0
  %29 = vmatpush.msra.mxu0 0.0
  %30 = vmatpush.msra.mxu0 0.0
  %31 = vmatpush.msra.mxu0 0.0
  %32 = vmatpush.msra.mxu0 %v15
  %33 = vmatpush.msra.mxu0 %v14
  %34 = vmatpush.msra.mxu0 %v13
  %35 = vmatpush.msra.mxu0 %v12
  %36 = vmatmul.f32.gmra.mxu0 %v18
  %v37 = vpop.f32.mrf.mxu0
  %v38 = vadd.f32 0.0, %v37
  %39 = vdwg.mxu0
  %vm40 = vcmask 7168
  %41 = vst.msk [vmem:[%s2] sm:$0xff] %vm40, %v38
  // Predicated region
  $region10: #{tpu_custom_call.1} parent=0 // pred_check
    _
  $region11: #{tpu_custom_call.1} parent=0 // pred_check_branch
    %43 = sbr.rel (0) target = $region13
  $region12: #{tpu_custom_call.1} parent=0 // pred_region
    _
  $region13: #{tpu_custom_call.1} parent=0 // pred_fallthru
    _
  // Predicated region
  $region14: #{tpu_custom_call.1} parent=0 // pred_check
    _
  $region15: #{tpu_custom_call.1} parent=0 // pred_check_branch
    %45 = sbr.rel (0) target = $region17
  $region16: #{tpu_custom_call.1} parent=0 // pred_region
    _
  $region17: #{tpu_custom_call.1} parent=0 // pred_fallthru
    _

</llo_original>
